<compile_context>
chip_gen: v6e
topology: v6e:2x2x1
jax: 0.10.0
libtpu: 0.0.40
codegen_flags: <defaults>
</compile_context>

<pallas_src>
import functools
from typing import Dict, Optional, Tuple

import numpy as np
import jax
import jax.numpy as jnp
from jax.experimental import pallas as pl
from jax.experimental.pallas import tpu as pltpu


# ----------------------------------------------------------------------------
# Tree structure (mirrors the PyTorch Node class)
# ----------------------------------------------------------------------------
class Node:
    def __init__(self, label=None, span=None, children=None):
        self.label = label
        self.span = span
        self.children = children or []
        self.h = None
        self.c = None
        self.f_gate = None

    def is_leaf(self) -> bool:
        return len(self.children) == 0

    def add_child(self, child):
        self.children.append(child)
        return self


def _round_up(a: int, b: int) -> int:
    return ((a + b - 1) // b) * b


# ----------------------------------------------------------------------------
# Pallas kernel: one whole tree level of Tree-LSTM cells (top-down)
# ----------------------------------------------------------------------------
def _tree_lstm_level_kernel(xph_ref, pc_ref, w_ref, b_ref,
                            h_ref, c_ref, fmean_ref):
    # xph: (tile_m, d_in + d_h)   — [x | parent_h] rows for this node tile
    # pc : (tile_m, d_h)          — parent cell states (zeros for roots)
    # w  : (d_in + d_h, 4*d_h)    — fused [[W_iou W_f], [U_iou U_f]] (resident)
    # b  : (1, 4*d_h)             — fused [b_iou | b_f]
    d = h_ref.shape[-1]

    acts = (jnp.dot(xph_ref[...], w_ref[...],
                    preferred_element_type=jnp.float32) + b_ref[...])

    # d is lane-aligned (multiple of 128 recommended) so these slices do not
    # cross (8,128) tile boundaries.
    i = jax.nn.sigmoid(acts[:, 0 * d:1 * d])
    o = jax.nn.sigmoid(acts[:, 1 * d:2 * d])
    u = jnp.tanh(acts[:, 2 * d:3 * d])
    f = jax.nn.sigmoid(acts[:, 3 * d:4 * d])

    # For root rows parent_h = parent_c = 0, so the U terms and f*pc vanish,
    # matching the PyTorch root branch exactly.
    c = i * u + f * pc_ref[...]
    h = o * jnp.tanh(c)

    h_ref[...] = h.astype(h_ref.dtype)
    c_ref[...] = c.astype(c_ref.dtype)
    fmean_ref[...] = jnp.mean(f, axis=-1, keepdims=True)


@functools.lru_cache(maxsize=None)
def _make_level_fn(d_in: int, d_hidden: int, m_pad: int, tile_m: int):
    d_k = d_in + d_hidden
    grid = (m_pad // tile_m,)

    # VMEM budget: 2x fused weights (double-buffer worst case) + act tiles.
    weight_bytes = d_k * 4 * d_hidden * 4
    bias_bytes = 4 * d_hidden * 4
    act_bytes = tile_m * (d_k + d_hidden) * 4
    out_bytes = tile_m * (2 * d_hidden + 1) * 4
    need = 2 * (weight_bytes + bias_bytes) + 2 * (act_bytes + out_bytes) + (2 << 20)
    vmem_limit = need if need > (32 << 20) else None
    # TODO(synk): for very large d_hidden (>~1.5k) on v7x (64 MiB VMEM) the
    # fully-resident fused weight no longer fits; an N/K-tiled grid axis with
    # an accumulator would be required instead of raising vmem_limit_bytes.

    call = pl.pallas_call(
        _tree_lstm_level_kernel,
        out_shape=(
            jax.ShapeDtypeStruct((m_pad, d_hidden), jnp.float32),  # h
            jax.ShapeDtypeStruct((m_pad, d_hidden), jnp.float32),  # c
            jax.ShapeDtypeStruct((m_pad, 1), jnp.float32),         # mean(f) per row
        ),
        grid_spec=pltpu.PrefetchScalarGridSpec(
            num_scalar_prefetch=0,
            grid=grid,
            in_specs=[
                pl.BlockSpec((tile_m, d_k), lambda i: (i, 0)),          # [x | ph]
                pl.BlockSpec((tile_m, d_hidden), lambda i: (i, 0)),     # parent_c
                pl.BlockSpec((d_k, 4 * d_hidden), lambda i: (0, 0)),    # fused W (resident)
                pl.BlockSpec((1, 4 * d_hidden), lambda i: (0, 0)),      # fused b (resident)
            ],
            out_specs=(
                pl.BlockSpec((tile_m, d_hidden), lambda i: (i, 0)),
                pl.BlockSpec((tile_m, d_hidden), lambda i: (i, 0)),
                pl.BlockSpec((tile_m, 1), lambda i: (i, 0)),
            ),
        ),
        compiler_params=pltpu.CompilerParams(
            dimension_semantics=("parallel",),
            vmem_limit_bytes=vmem_limit,
        ),
    )

    def level_fn(x, ph, pc, w4, b4):
        xph = jnp.concatenate([x, ph], axis=-1)
        return call(xph, pc, w4, b4)

    return jax.jit(level_fn)


# ----------------------------------------------------------------------------
# Module wrapper
# ----------------------------------------------------------------------------
class TopDownTreeLSTM:
    """JAX / Pallas re-implementation of the PyTorch TopDownTreeLSTM."""

    def __init__(self, d_in=768, d_hidden=768, key=None):
        self.d_in = d_in
        self.d_hidden = d_hidden
        key = jax.random.PRNGKey(0) if key is None else key
        k = jax.random.split(key, 6)
        s_in = 1.0 / jnp.sqrt(d_in)
        s_h = 1.0 / jnp.sqrt(d_hidden)
        # Stored as (in, out) = transposed torch.nn.Linear weights.
        self.W_iou = jax.random.uniform(k[0], (d_in, 3 * d_hidden),
                                        minval=-s_in, maxval=s_in, dtype=jnp.float32)
        self.b_iou = jax.random.uniform(k[1], (1, 3 * d_hidden),
                                        minval=-s_in, maxval=s_in, dtype=jnp.float32)
        self.U_iou = jax.random.uniform(k[2], (d_hidden, 3 * d_hidden),
                                        minval=-s_h, maxval=s_h, dtype=jnp.float32)
        self.W_f = jax.random.uniform(k[3], (d_in, d_hidden),
                                      minval=-s_in, maxval=s_in, dtype=jnp.float32)
        self.b_f = jax.random.uniform(k[4], (1, d_hidden),
                                      minval=-s_in, maxval=s_in, dtype=jnp.float32)
        self.U_f = jax.random.uniform(k[5], (d_hidden, d_hidden),
                                      minval=-s_h, maxval=s_h, dtype=jnp.float32)

        # Fused weight/bias used by the Pallas kernel:
        #   [x | ph] @ [[W_iou W_f], [U_iou U_f]] + [b_iou | b_f]
        # TODO(synk): on v6e/v7x casting W4/b4 to bfloat16 halves HBM traffic;
        # kept float32 here so the script's strict reference check passes.
        self.W4 = jnp.concatenate(
            [jnp.concatenate([self.W_iou, self.W_f], axis=1),
             jnp.concatenate([self.U_iou, self.U_f], axis=1)], axis=0)
        self.b4 = jnp.concatenate([self.b_iou, self.b_f], axis=1)

    # ------------------------------------------------------------------ utils
    def _lookup_1d(self, node: Node, vec_lookup: Dict[int, jnp.ndarray]) -> jnp.ndarray:
        token_idx = node.span[0]
        if token_idx not in vec_lookup:
            # PyTorch code zeros with d_hidden; valid because d_in == d_hidden here.
            return jnp.zeros((self.d_hidden,), dtype=jnp.float32)
        return jnp.asarray(vec_lookup[token_idx], dtype=jnp.float32).reshape(-1)

    # ---------------------------------------------------------------- forward
    def forward(self, node: Node, vec_lookup: Dict[int, jnp.ndarray],
                parent_h: Optional[jnp.ndarray] = None,
                parent_c: Optional[jnp.ndarray] = None
                ) -> Tuple[jnp.ndarray, jnp.ndarray]:
        """Top-down traversal of the subtree rooted at `node`, level-batched."""
        d = self.d_hidden
        if parent_h is None or parent_c is None:
            ph0 = jnp.zeros((1, d), dtype=jnp.float32)
            pc0 = jnp.zeros((1, d), dtype=jnp.float32)
            root_has_parent = False
        else:
            ph0 = jnp.asarray(parent_h, jnp.float32).reshape(1, d)
            pc0 = jnp.asarray(parent_c, jnp.float32).reshape(1, d)
            root_has_parent = True

        level_nodes = [node]
        PH, PC = ph0, pc0
        has_parent = [root_has_parent]
        fgate_records = []  # (fmean_device_array, [(node, row), ...])

        while level_nodes:
            M = len(level_nodes)
            tile_m = 128 if M > 128 else max(8, _round_up(M, 8))
            m_pad = _round_up(M, tile_m)

            X = jnp.stack([self._lookup_1d(n, vec_lookup) for n in level_nodes], axis=0)
            Xp = jnp.pad(X, ((0, m_pad - M), (0, 0)))
            PHp = jnp.pad(PH, ((0, m_pad - M), (0, 0)))
            PCp = jnp.pad(PC, ((0, m_pad - M), (0, 0)))

            level_fn = _make_level_fn(self.d_in, self.d_hidden, m_pad, tile_m)
            H, C, FM = level_fn(Xp, PHp, PCp, self.W4, self.b4)

            rows = []
            for r, n in enumerate(level_nodes):
                n.h = H[r]
                n.c = C[r]
                if has_parent[r]:
                    rows.append((n, r))
            if rows:
                fgate_records.append((FM, rows))

            # Build next level: gather each child's parent (h, c) rows on device.
            next_nodes, parent_rows = [], []
            for r, n in enumerate(level_nodes):
                for ch in n.children:
                    next_nodes.append(ch)
                    parent_rows.append(r)
            if next_nodes:
                idx = jnp.asarray(parent_rows, dtype=jnp.int32)
                PH = jnp.take(H, idx, axis=0)
                PC = jnp.take(C, idx, axis=0)
                has_parent = [True] * len(next_nodes)
            level_nodes = next_nodes

        # Resolve f_gate bookkeeping: one device->host transfer per level.
        for FM, rows in fgate_records:
            fm_host = np.asarray(FM)
            for n, r in rows:
                n.f_gate = float(fm_host[r, 0])

        return node.h, node.c

    # --------------------------------------------------- pure-JAX reference
    def forward_ref(self, node: Node, vec_lookup, parent_h=None, parent_c=None):
        x = self._lookup_1d(node, vec_lookup)
        iou = x @ self.W_iou + self.b_iou[0]
        d = self.d_hidden
        if parent_h is not None and parent_c is not None:
            iou = iou + parent_h @ self.U_iou
        i = jax.nn.sigmoid(iou[:d])
        o = jax.nn.sigmoid(iou[d:2 * d])
        u = jnp.tanh(iou[2 * d:])
        if parent_h is None or parent_c is None:
            c = i * u
            fmean = None
        else:
            f = jax.nn.sigmoid(x @ self.W_f + self.b_f[0] + parent_h @ self.U_f)
            c = i * u + f * parent_c
            fmean = float(jnp.mean(f))
        h = o * jnp.tanh(c)
        outs = {id(node): (h, c, fmean)}
        for child in node.children:
            outs.update(self.forward_ref(child, vec_lookup, h, c))
        return outs


# ----------------------------------------------------------------------------
# Main
# ----------------------------------------------------------------------------
if __name__ == "__main__":
    D = 128  # d_in == d_hidden (small, lane-aligned)
    key = jax.random.PRNGKey(0)
    kparams, kvecs = jax.random.split(key)

    model = TopDownTreeLSTM(d_in=D, d_hidden=D, key=kparams)

    # Small tree:
    #        root (span 0..6)
    #        /            \
    #   left (0..3)    right (3..6)
    #    /     \            \
    # (0..1) (1..3)        (4..6)
    root = Node("S", (0, 6))
    left = Node("NP", (0, 3))
    right = Node("VP", (3, 6))
    left.add_child(Node("DT", (0, 1)))
    left.add_child(Node("NN", (1, 3)))
    right.add_child(Node("VB", (4, 6)))   # token 4 missing from lookup -> zeros path
    root.add_child(left)
    root.add_child(right)

    # Token embeddings for indices 0,1,3 (index 4 intentionally absent).
    vecs = jax.random.normal(kvecs, (3, D), dtype=jnp.float32)
    vec_lookup = {0: vecs[0], 1: vecs[1], 3: vecs[2]}

    h, c = model.forward(root, vec_lookup)
    jax.block_until_ready((h, c))

    # Correctness check against a pure-JAX reference of the same recursion.
    ref = model.forward_ref(root, vec_lookup)

    def collect(n, acc):
        acc.append(n)
        for ch in n.children:
            collect(ch, acc)
        return acc

    ok = True
    for n in collect(root, []):
        h_ref, c_ref, f_ref = ref[id(n)]
        ok &= bool(jnp.allclose(n.h, h_ref, atol=2e-5, rtol=2e-5))
        ok &= bool(jnp.allclose(n.c, c_ref, atol=2e-5, rtol=2e-5))
        if f_ref is None:
            ok &= n.f_gate is None
        else:
            ok &= abs(n.f_gate - f_ref) < 1e-4
    assert ok, "Pallas kernel output mismatch vs reference"

    print("KERNEL_OK")
</pallas_src>

<mosaic_0001>
module attributes {stable_mosaic.version = 11 : i64} {
  func.func @_tree_lstm_level_kernel(%arg0: i32, %arg1: memref<8x256xf32, #tpu.memory_space<vmem>>, %arg2: memref<8x128xf32, #tpu.memory_space<vmem>>, %arg3: memref<256x512xf32, #tpu.memory_space<vmem>>, %arg4: memref<1x512xf32, #tpu.memory_space<vmem>>, %arg5: memref<8x128xf32, #tpu.memory_space<vmem>>, %arg6: memref<8x128xf32, #tpu.memory_space<vmem>>, %arg7: memref<8x1xf32, #tpu.memory_space<vmem>>) attributes {dimension_semantics = [#tpu.dimension_semantics<parallel>], iteration_bounds = array<i64: 1>, scalar_prefetch = 0 : i64, scratch_operands = 0 : i64, tpu.core_type = #tpu.core_type<tc>, window_params = [{transform_indices = @transform_0, window_bounds = array<i64: 8, 256>}, {transform_indices = @transform_1, window_bounds = array<i64: 8, 128>}, {pipeline_mode = #tpu.pipeline_mode<synchronous>, transform_indices = @transform_2, window_bounds = array<i64: 256, 512>}, {pipeline_mode = #tpu.pipeline_mode<synchronous>, transform_indices = @transform_3, window_bounds = array<i64: 1, 512>}, {transform_indices = @transform_4, window_bounds = array<i64: 8, 128>}, {transform_indices = @transform_5, window_bounds = array<i64: 8, 128>}, {transform_indices = @transform_6, window_bounds = array<i64: 8, 1>}]} {
    %c0 = arith.constant 0 : index
    %c0_0 = arith.constant 0 : index
    %0 = vector.load %arg1[%c0, %c0_0] : memref<8x256xf32, #tpu.memory_space<vmem>>, vector<8x256xf32>
    %c0_1 = arith.constant 0 : index
    %c0_2 = arith.constant 0 : index
    %1 = vector.load %arg3[%c0_1, %c0_2] : memref<256x512xf32, #tpu.memory_space<vmem>>, vector<256x512xf32>
    %cst = arith.constant dense<0.000000e+00> : vector<8x512xf32>
    %2 = tpu.matmul %0, %1, %cst {dimension_numbers = #tpu.dot_dimension_numbers<[1], [0], [0], [1], [0, 0, 1, 1], [], []>} : vector<8x256xf32>, vector<256x512xf32>, vector<8x512xf32> -> vector<8x512xf32>
    %c0_3 = arith.constant 0 : index
    %c0_4 = arith.constant 0 : index
    %3 = vector.load %arg4[%c0_3, %c0_4] : memref<1x512xf32, #tpu.memory_space<vmem>>, vector<1x512xf32>
    %4 = vector.broadcast %3 : vector<1x512xf32> to vector<8x512xf32>
    %5 = arith.addf %2, %4 : vector<8x512xf32>
    %6 = vector.extract_strided_slice %5 {offsets = [0, 0], sizes = [8, 128], strides = [1, 1]} : vector<8x512xf32> to vector<8x128xf32>
    %7 = arith.negf %6 : vector<8x128xf32>
    %8 = math.exp %7 : vector<8x128xf32>
    %cst_5 = arith.constant 1.000000e+00 : f32
    %9 = vector.broadcast %cst_5 : f32 to vector<8x128xf32>
    %10 = arith.addf %9, %8 : vector<8x128xf32>
    %11 = arith.divf %9, %10 : vector<8x128xf32>
    %12 = vector.extract_strided_slice %5 {offsets = [0, 128], sizes = [8, 128], strides = [1, 1]} : vector<8x512xf32> to vector<8x128xf32>
    %13 = arith.negf %12 : vector<8x128xf32>
    %14 = math.exp %13 : vector<8x128xf32>
    %cst_6 = arith.constant 1.000000e+00 : f32
    %15 = vector.broadcast %cst_6 : f32 to vector<8x128xf32>
    %16 = arith.addf %15, %14 : vector<8x128xf32>
    %17 = arith.divf %15, %16 : vector<8x128xf32>
    %18 = vector.extract_strided_slice %5 {offsets = [0, 256], sizes = [8, 128], strides = [1, 1]} : vector<8x512xf32> to vector<8x128xf32>
    %19 = math.tanh %18 : vector<8x128xf32>
    %20 = vector.extract_strided_slice %5 {offsets = [0, 384], sizes = [8, 128], strides = [1, 1]} : vector<8x512xf32> to vector<8x128xf32>
    %21 = arith.negf %20 : vector<8x128xf32>
    %22 = math.exp %21 : vector<8x128xf32>
    %cst_7 = arith.constant 1.000000e+00 : f32
    %23 = vector.broadcast %cst_7 : f32 to vector<8x128xf32>
    %24 = arith.addf %23, %22 : vector<8x128xf32>
    %25 = arith.divf %23, %24 : vector<8x128xf32>
    %26 = arith.mulf %11, %19 : vector<8x128xf32>
    %c0_8 = arith.constant 0 : index
    %c0_9 = arith.constant 0 : index
    %27 = vector.load %arg2[%c0_8, %c0_9] : memref<8x128xf32, #tpu.memory_space<vmem>>, vector<8x128xf32>
    %28 = arith.mulf %25, %27 : vector<8x128xf32>
    %29 = arith.addf %26, %28 : vector<8x128xf32>
    %30 = math.tanh %29 : vector<8x128xf32>
    %31 = arith.mulf %17, %30 : vector<8x128xf32>
    %c0_10 = arith.constant 0 : index
    %c0_11 = arith.constant 0 : index
    %32 = vector.load %arg5[%c0_10, %c0_11] : memref<8x128xf32, #tpu.memory_space<vmem>>, vector<8x128xf32>
    tpu.vector_store %arg5[%c0_10, %c0_11], %31 {strides = array<i32>} : memref<8x128xf32, #tpu.memory_space<vmem>>, vector<8x128xf32>,
    %c0_12 = arith.constant 0 : index
    %c0_13 = arith.constant 0 : index
    %33 = vector.load %arg6[%c0_12, %c0_13] : memref<8x128xf32, #tpu.memory_space<vmem>>, vector<8x128xf32>
    tpu.vector_store %arg6[%c0_12, %c0_13], %29 {strides = array<i32>} : memref<8x128xf32, #tpu.memory_space<vmem>>, vector<8x128xf32>,
    %cst_14 = arith.constant dense<0.000000e+00> : vector<8xf32>
    %34 = vector.multi_reduction <add>, %25, %cst_14 [1] : vector<8x128xf32> to vector<8xf32>
    %35 = vector.shape_cast %34 : vector<8xf32> to vector<8x1xf32>
    %cst_15 = arith.constant 1.280000e+02 : f32
    %36 = vector.broadcast %cst_15 : f32 to vector<8x1xf32>
    %37 = arith.divf %35, %36 : vector<8x1xf32>
    %c0_16 = arith.constant 0 : index
    %c0_17 = arith.constant 0 : index
    %38 = vector.load %arg7[%c0_16, %c0_17] : memref<8x1xf32, #tpu.memory_space<vmem>>, vector<8x1xf32>
    tpu.vector_store %arg7[%c0_16, %c0_17], %37 {strides = array<i32>} : memref<8x1xf32, #tpu.memory_space<vmem>>, vector<8x1xf32>,
    return
  }
  func.func @transform_0(%arg0: i32) -> (i32, i32) {
    %c0_i32 = arith.constant 0 : i32
    %c0_i32_0 = arith.constant 0 : i32
    return %arg0, %c0_i32 : i32, i32
  }
  func.func @transform_1(%arg0: i32) -> (i32, i32) {
    %c0_i32 = arith.constant 0 : i32
    %c0_i32_0 = arith.constant 0 : i32
    return %arg0, %c0_i32 : i32, i32
  }
  func.func @transform_2(%arg0: i32) -> (i32, i32) {
    %c0_i32 = arith.constant 0 : i32
    %c0_i32_0 = arith.constant 0 : i32
    %c0_i32_1 = arith.constant 0 : i32
    return %c0_i32, %c0_i32_0 : i32, i32
  }
  func.func @transform_3(%arg0: i32) -> (i32, i32) {
    %c0_i32 = arith.constant 0 : i32
    %c0_i32_0 = arith.constant 0 : i32
    %c0_i32_1 = arith.constant 0 : i32
    return %c0_i32, %c0_i32_0 : i32, i32
  }
  func.func @transform_4(%arg0: i32) -> (i32, i32) {
    %c0_i32 = arith.constant 0 : i32
    %c0_i32_0 = arith.constant 0 : i32
    return %arg0, %c0_i32 : i32, i32
  }
  func.func @transform_5(%arg0: i32) -> (i32, i32) {
    %c0_i32 = arith.constant 0 : i32
    %c0_i32_0 = arith.constant 0 : i32
    return %arg0, %c0_i32 : i32, i32
  }
  func.func @transform_6(%arg0: i32) -> (i32, i32) {
    %c0_i32 = arith.constant 0 : i32
    %c0_i32_0 = arith.constant 0 : i32
    return %arg0, %c0_i32 : i32, i32
  }
}

</mosaic_0001>

<llo_original>
// kernel: level_fn.1
$region0: #{level_fn.1}
  #allocation0 [shape = 'u32[]', space=smem, size = 0x4, offset = 0x4, fixed_abs, tag = 'smem constant byte address 0x4 - core index']
  #allocation1 [shape = 'u32[144,128]{1,0:T(1,128)}', space=vmem, size = 0x12000, scoped, tag = 'internal scratch']
  %s0 = inlined_call_operand.vmem [shape: f32[8,256], index: 0, kind: input, shape index: {}]
  %s1 = inlined_call_operand.vmem [shape: f32[8,128], index: 1, kind: input, shape index: {}]
  %s2 = inlined_call_operand.hbm [shape: f32[256,512], index: 2, kind: input, shape index: {}]
  %s3 = inlined_call_operand.vmem [shape: f32[1,512], index: 3, kind: input, shape index: {}]
  %s4 = inlined_call_operand.hbm [shape: f32[8,128], index: 4, kind: output, shape index: {0}]
  %s5 = inlined_call_operand.hbm [shape: f32[8,128], index: 5, kind: output, shape index: {1}]
  %s6 = inlined_call_operand.vmem [shape: f32[8,1], index: 6, kind: output, shape index: {2}]
  %7 = xla_tuple %s4, %s5, %s6
  %s8 = sld [smem:[#allocation0]]
  $region46: #{level_fn.1} parent=0
    _
  %s10 = ssub.s32 1, %s8
  %s11 = scalar_select 0, %s10, %s8
  $region1: #{level_fn.1} parent=0
    #allocation2 [shape = 'u8[524288]{0}', space=vmem, size = 0x80000, scoped, tag = 'input window, operand 2, single buffered']
    #allocation3 [shape = 's32[1]{0}', space=sflag, size = 0x4, scoped, tag = 'scoped memory for level_fn.1']
    #allocation4 [shape = 's32[1]{0}', space=sflag, size = 0x4, scoped, tag = 'scoped memory for level_fn.1']
    #allocation5 [shape = 'u8[4096]{0}', space=vmem, size = 0x1000, scoped, tag = 'output window, operand 0, single buffered']
    #allocation6 [shape = 'u8[4096]{0}', space=vmem, size = 0x1000, scoped, tag = 'output window, operand 1, single buffered']
    #allocation7 [shape = 's32[1]{0}', space=sflag, size = 0x4, scoped, tag = 'scoped memory for level_fn.1']
    %12 = vsyncpa [#allocation3], 0
    %13 = vsyncpa [#allocation4], 0
    %14 = vsyncpa [#allocation7], 0
    // Predicated region
    $region2: #{level_fn.1} parent=1 // pred_check
      _
    $region3: #{level_fn.1} parent=1 // pred_check_branch
      %16 = sbr.rel (0) target = $region5
    $region4: #{level_fn.1} parent=1 // pred_region
      _
    $region5: #{level_fn.1} parent=1 // pred_fallthru
      _
    // Predicated region
    $region6: #{level_fn.1} parent=1 // pred_check
      _
    $region7: #{level_fn.1} parent=1 // pred_check_branch
      %18 = sbr.rel (0) target = $region9
    $region8: #{level_fn.1} parent=1 // pred_region
      _
    $region9: #{level_fn.1} parent=1 // pred_fallthru
      _
    // Predicated region
    $region10: #{level_fn.1} parent=1 // pred_check
      _
    $region11: #{level_fn.1} parent=1 // pred_check_branch
      %20 = sbr.rel (0) target = $region13
    $region12: #{level_fn.1} parent=1 // pred_region
      %s22 = ssub.s32 16384, 16384
      %23 = vsyncadd [#allocation3], %s22
      %s24 = sshll.u32 [#allocation2], 4
      %s25 = int_to_ptr.vmem [resolvable:$true] %s24
      %30 = dma.hbm_to_vmem [thread:$0]  %s2, 16384, %s25, [#allocation3], 512, 512, 32
    $region13: #{level_fn.1} parent=1 // pred_fallthru
      _
    // Predicated region
    $region14: #{level_fn.1} parent=1 // pred_check
      _
    $region15: #{level_fn.1} parent=1 // pred_check_branch
      %32 = sbr.rel (0) target = $region17
    $region16: #{level_fn.1} parent=1 // pred_region
      _
    $region17: #{level_fn.1} parent=1 // pred_fallthru
      _
    // Predicated region
    $region18: #{level_fn.1} parent=1 // pred_check
      _
    $region19: #{level_fn.1} parent=1 // pred_check_branch
      %34 = sbr.rel (0) target = $region21
    $region20: #{level_fn.1} parent=1 // pred_region
      %35 = dma.done [#allocation3], 16384
    $region21: #{level_fn.1} parent=1 // pred_fallthru
      _
    %v36 = vld [vmem:[%s0] sm:$0xff]
    %v37 = vld [vmem:[%s0 + $0x8] sm:$0xff]
    %v38 = vld [vmem:[#allocation2] sm:$0xff]
    %v39 = vld [vmem:[#allocation2 + $0x8] sm:$0xff]
    %v40 = vld [vmem:[#allocation2 + $0x10] sm:$0xff]
    %v41 = vld [vmem:[#allocation2 + $0x18] sm:$0xff]
    %v42 = vld [vmem:[#allocation2 + $0x20] sm:$0xff]
    %v43 = vld [vmem:[#allocation2 + $0x28] sm:$0xff]
    %v44 = vld [vmem:[#allocation2 + $0x30] sm:$0xff]
    %v45 = vld [vmem:[#allocation2 + $0x38] sm:$0xff]
    %v46 = vld [vmem:[#allocation2 + $0x40] sm:$0xff]
    %v47 = vld [vmem:[#allocation2 + $0x48] sm:$0xff]
    %v48 = vld [vmem:[#allocation2 + $0x50] sm:$0xff]
    %v49 = vld [vmem:[#allocation2 + $0x58] sm:$0xff]
    %v50 = vld [vmem:[#allocation2 + $0x60] sm:$0xff]
    %v51 = vld [vmem:[#allocation2 + $0x68] sm:$0xff]
    %v52 = vld [vmem:[#allocation2 + $0x70] sm:$0xff]
    %v53 = vld [vmem:[#allocation2 + $0x78] sm:$0xff]
    %v54 = vld [vmem:[#allocation2 + $0x80] sm:$0xff]
    %v55 = vld [vmem:[#allocation2 + $0x88] sm:$0xff]
    %v56 = vld [vmem:[#allocation2 + $0x90] sm:$0xff]
    %v57 = vld [vmem:[#allocation2 + $0x98] sm:$0xff]
    %v58 = vld [vmem:[#allocation2 + $0xa0] sm:$0xff]
    %v59 = vld [vmem:[#allocation2 + $0xa8] sm:$0xff]
    %v60 = vld [vmem:[#allocation2 + $0xb0] sm:$0xff]
    %v61 = vld [vmem:[#allocation2 + $0xb8] sm:$0xff]
    %v62 = vld [vmem:[#allocation2 + $0xc0] sm:$0xff]
    %v63 = vld [vmem:[#allocation2 + $0xc8] sm:$0xff]
    %v64 = vld [vmem:[#allocation2 + $0xd0] sm:$0xff]
    %v65 = vld [vmem:[#allocation2 + $0xd8] sm:$0xff]
    %v66 = vld [vmem:[#allocation2 + $0xe0] sm:$0xff]
    %v67 = vld [vmem:[#allocation2 + $0xe8] sm:$0xff]
    %v68 = vld [vmem:[#allocation2 + $0xf0] sm:$0xff]
    %v69 = vld [vmem:[#allocation2 + $0xf8] sm:$0xff]
    %v70 = vld [vmem:[#allocation2 + $0x100] sm:$0xff]
    %v71 = vld [vmem:[#allocation2 + $0x108] sm:$0xff]
    %v72 = vld [vmem:[#allocation2 + $0x110] sm:$0xff]
    %v73 = vld [vmem:[#allocation2 + $0x118] sm:$0xff]
    %v74 = vld [vmem:[#allocation2 + $0x120] sm:$0xff]
    %v75 = vld [vmem:[#allocation2 + $0x128] sm:$0xff]
    %v76 = vld [vmem:[#allocation2 + $0x130] sm:$0xff]
    %v77 = vld [vmem:[#allocation2 + $0x138] sm:$0xff]
    %v78 = vld [vmem:[#allocation2 + $0x140] sm:$0xff]
    %v79 = vld [vmem:[#allocation2 + $0x148] sm:$0xff]
    %v80 = vld [vmem:[#allocation2 + $0x150] sm:$0xff]
    %v81 = vld [vmem:[#allocation2 + $0x158] sm:$0xff]
    %v82 = vld [vmem:[#allocation2 + $0x160] sm:$0xff]
    %v83 = vld [vmem:[#allocation2 + $0x168] sm:$0xff]
    %v84 = vld [vmem:[#allocation2 + $0x170] sm:$0xff]
    %v85 = vld [vmem:[#allocation2 + $0x178] sm:$0xff]
    %v86 = vld [vmem:[#allocation2 + $0x180] sm:$0xff]
    %v87 = vld [vmem:[#allocation2 + $0x188] sm:$0xff]
    %v88 = vld [vmem:[#allocation2 + $0x190] sm:$0xff]
    %v89 = vld [vmem:[#allocation2 + $0x198] sm:$0xff]
    %v90 = vld [vmem:[#allocation2 + $0x1a0] sm:$0xff]
    %v91 = vld [vmem:[#allocation2 + $0x1a8] sm:$0xff]
    %v92 = vld [vmem:[#allocation2 + $0x1b0] sm:$0xff]
    %v93 = vld [vmem:[#allocation2 + $0x1b8] sm:$0xff]
    %v94 = vld [vmem:[#allocation2 + $0x1c0] sm:$0xff]
    %v95 = vld [vmem:[#allocation2 + $0x1c8] sm:$0xff]
    %v96 = vld [vmem:[#allocation2 + $0x1d0] sm:$0xff]
    %v97 = vld [vmem:[#allocation2 + $0x1d8] sm:$0xff]
    %v98 = vld [vmem:[#allocation2 + $0x1e0] sm:$0xff]
    %v99 = vld [vmem:[#allocation2 + $0x1e8] sm:$0xff]
    %v100 = vld [vmem:[#allocation2 + $0x1f0] sm:$0xff]
    %v101 = vld [vmem:[#allocation2 + $0x1f8] sm:$0xff]
    %v102 = vld [vmem:[#allocation2 + $0x200] sm:$0xff]
    %v103 = vld [vmem:[#allocation2 + $0x208] sm:$0xff]
    %v104 = vld [vmem:[#allocation2 + $0x210] sm:$0xff]
    %v105 = vld [vmem:[#allocation2 + $0x218] sm:$0xff]
    %v106 = vld [vmem:[#allocation2 + $0x220] sm:$0xff]
    %v107 = vld [vmem:[#allocation2 + $0x228] sm:$0xff]
    %v108 = vld [vmem:[#allocation2 + $0x230] sm:$0xff]
    %v109 = vld [vmem:[#allocation2 + $0x238] sm:$0xff]
    %v110 = vld [vmem:[#allocation2 + $0x240] sm:$0xff]
    %v111 = vld [vmem:[#allocation2 + $0x248] sm:$0xff]
    %v112 = vld [vmem:[#allocation2 + $0x250] sm:$0xff]
    %v113 = vld [vmem:[#allocation2 + $0x258] sm:$0xff]
    %v114 = vld [vmem:[#allocation2 + $0x260] sm:$0xff]
    %v115 = vld [vmem:[#allocation2 + $0x268] sm:$0xff]
    %v116 = vld [vmem:[#allocation2 + $0x270] sm:$0xff]
    %v117 = vld [vmem:[#allocation2 + $0x278] sm:$0xff]
    %v118 = vld [vmem:[#allocation2 + $0x280] sm:$0xff]
    %v119 = vld [vmem:[#allocation2 + $0x288] sm:$0xff]
    %v120 = vld [vmem:[#allocation2 + $0x290] sm:$0xff]
    %v121 = vld [vmem:[#allocation2 + $0x298] sm:$0xff]
    %v122 = vld [vmem:[#allocation2 + $0x2a0] sm:$0xff]
    %v123 = vld [vmem:[#allocation2 + $0x2a8] sm:$0xff]
    %v124 = vld [vmem:[#allocation2 + $0x2b0] sm:$0xff]
    %v125 = vld [vmem:[#allocation2 + $0x2b8] sm:$0xff]
    %v126 = vld [vmem:[#allocation2 + $0x2c0] sm:$0xff]
    %v127 = vld [vmem:[#allocation2 + $0x2c8] sm:$0xff]
    %v128 = vld [vmem:[#allocation2 + $0x2d0] sm:$0xff]
    %v129 = vld [vmem:[#allocation2 + $0x2d8] sm:$0xff]
    %v130 = vld [vmem:[#allocation2 + $0x2e0] sm:$0xff]
    %v131 = vld [vmem:[#allocation2 + $0x2e8] sm:$0xff]
    %v132 = vld [vmem:[#allocation2 + $0x2f0] sm:$0xff]
    %v133 = vld [vmem:[#allocation2 + $0x2f8] sm:$0xff]
    %v134 = vld [vmem:[#allocation2 + $0x300] sm:$0xff]
    %v135 = vld [vmem:[#allocation2 + $0x308] sm:$0xff]
    %v136 = vld [vmem:[#allocation2 + $0x310] sm:$0xff]
    %v137 = vld [vmem:[#allocation2 + $0x318] sm:$0xff]
    %v138 = vld [vmem:[#allocation2 + $0x320] sm:$0xff]
    %v139 = vld [vmem:[#allocation2 + $0x328] sm:$0xff]
    %v140 = vld [vmem:[#allocation2 + $0x330] sm:$0xff]
    %v141 = vld [vmem:[#allocation2 + $0x338] sm:$0xff]
    %v142 = vld [vmem:[#allocation2 + $0x340] sm:$0xff]
    %v143 = vld [vmem:[#allocation2 + $0x348] sm:$0xff]
    %v144 = vld [vmem:[#allocation2 + $0x350] sm:$0xff]
    %v145 = vld [vmem:[#allocation2 + $0x358] sm:$0xff]
    %v146 = vld [vmem:[#allocation2 + $0x360] sm:$0xff]
    %v147 = vld [vmem:[#allocation2 + $0x368] sm:$0xff]
    %v148 = vld [vmem:[#allocation2 + $0x370] sm:$0xff]
    %v149 = vld [vmem:[#allocation2 + $0x378] sm:$0xff]
    %v150 = vld [vmem:[#allocation2 + $0x380] sm:$0xff]
    %v151 = vld [vmem:[#allocation2 + $0x388] sm:$0xff]
    %v152 = vld [vmem:[#allocation2 + $0x390] sm:$0xff]
    %v153 = vld [vmem:[#allocation2 + $0x398] sm:$0xff]
    %v154 = vld [vmem:[#allocation2 + $0x3a0] sm:$0xff]
    %v155 = vld [vmem:[#allocation2 + $0x3a8] sm:$0xff]
    %v156 = vld [vmem:[#allocation2 + $0x3b0] sm:$0xff]
    %v157 = vld [vmem:[#allocation2 + $0x3b8] sm:$0xff]
    %v158 = vld [vmem:[#allocation2 + $0x3c0] sm:$0xff]
    %v159 = vld [vmem:[#allocation2 + $0x3c8] sm:$0xff]
    %v160 = vld [vmem:[#allocation2 + $0x3d0] sm:$0xff]
    %v161 = vld [vmem:[#allocation2 + $0x3d8] sm:$0xff]
    %v162 = vld [vmem:[#allocation2 + $0x3e0] sm:$0xff]
    %v163 = vld [vmem:[#allocation2 + $0x3e8] sm:$0xff]
    %v164 = vld [vmem:[#allocation2 + $0x3f0] sm:$0xff]
    %v165 = vld [vmem:[#allocation2 + $0x3f8] sm:$0xff]
    %v166 = vld [vmem:[%s3] sm:$0xf]
    %v168 = vlaneseq
    %v169 = vshrl.u32 %v168, 7
    %v170 = vsub.s32 0, %v169
    %v171 = vrot.slane %v166, %v170
    %v172 = vlaneseq
    %v173 = vshrl.u32 %v172, 7
    %v174 = vsub.s32 1, %v173
    %v175 = vrot.slane %v166, %v174
    %v176 = vlaneseq
    %v177 = vshrl.u32 %v176, 7
    %v178 = vsub.s32 2, %v177
    %v179 = vrot.slane %v166, %v178
    %v180 = vlaneseq
    %v181 = vshrl.u32 %v180, 7
    %v182 = vsub.s32 3, %v181
    %v183 = vrot.slane %v166, %v182
    %188 = vmatprep.subr.mxu0 %v99
    %189 = vmatpush1.msra.mxu0 %v98
    %190 = vmatprep.subr.mxu0 %v95
    %191 = vmatpush1.msra.mxu0 %v94
    %192 = vmatprep.subr.mxu0 %v91
    %193 = vmatpush1.msra.mxu0 %v90
    %194 = vmatprep.subr.mxu0 %v87
    %195 = vmatpush1.msra.mxu0 %v86
    %196 = vmatprep.subr.mxu0 %v83
    %197 = vmatpush1.msra.mxu0 %v82
    %198 = vmatprep.subr.mxu0 %v79
    %199 = vmatpush1.msra.mxu0 %v78
    %200 = vmatprep.subr.mxu0 %v75
    %201 = vmatpush1.msra.mxu0 %v74
    %202 = vmatprep.subr.mxu0 %v71
    %203 = vmatpush1.msra.mxu0 %v70
    %204 = vmatprep.subr.mxu0 %v67
    %205 = vmatpush1.msra.mxu0 %v66
    %206 = vmatprep.subr.mxu0 %v63
    %207 = vmatpush1.msra.mxu0 %v62
    %208 = vmatprep.subr.mxu0 %v59
    %209 = vmatpush1.msra.mxu0 %v58
    %210 = vmatprep.subr.mxu0 %v55
    %211 = vmatpush1.msra.mxu0 %v54
    %212 = vmatprep.subr.mxu0 %v51
    %213 = vmatpush1.msra.mxu0 %v50
    %214 = vmatprep.subr.mxu0 %v47
    %215 = vmatpush1.msra.mxu0 %v46
    %216 = vmatprep.subr.mxu0 %v43
    %217 = vmatpush1.msra.mxu0 %v42
    %218 = vmatprep.subr.mxu0 %v39
    %219 = vmatpush1.msra.mxu0 %v38
    %220 = vmatprep.subr.mxu0 %v163
    %221 = vmatpush2.msra.mxu0 %v162
    %222 = vmatprep.subr.mxu0 %v159
    %223 = vmatpush2.msra.mxu0 %v158
    %224 = vmatprep.subr.mxu0 %v155
    %225 = vmatpush2.msra.mxu0 %v154
    %226 = vmatprep.subr.mxu0 %v151
    %227 = vmatpush2.msra.mxu0 %v150
    %228 = vmatprep.subr.mxu0 %v147
    %229 = vmatpush2.msra.mxu0 %v146
    %230 = vmatprep.subr.mxu0 %v143
    %231 = vmatpush2.msra.mxu0 %v142
    %232 = vmatprep.subr.mxu0 %v139
    %233 = vmatpush2.msra.mxu0 %v138
    %234 = vmatprep.subr.mxu0 %v135
    %235 = vmatpush2.msra.mxu0 %v134
    %236 = vmatprep.subr.mxu0 %v131
    %237 = vmatpush2.msra.mxu0 %v130
    %238 = vmatprep.subr.mxu0 %v127
    %239 = vmatpush2.msra.mxu0 %v126
    %240 = vmatprep.subr.mxu0 %v123
    %241 = vmatpush2.msra.mxu0 %v122
    %242 = vmatprep.subr.mxu0 %v119
    %243 = vmatpush2.msra.mxu0 %v118
    %244 = vmatprep.subr.mxu0 %v115
    %245 = vmatpush2.msra.mxu0 %v114
    %246 = vmatprep.subr.mxu0 %v111
    %247 = vmatpush2.msra.mxu0 %v110
    %248 = vmatprep.subr.mxu0 %v107
    %249 = vmatpush2.msra.mxu0 %v106
    %250 = vmatprep.subr.mxu0 %v103
    %251 = vmatpush2.msra.mxu0 %v102
    %252 = vmatprep.mubr.f32.mxu0 %v37
    %253 = vmatmul.mubr.f32.gmra.mxu0 %v36
    %v254 = vpop.f32.mrf.mxu0
    %v255 = vadd.f32 %v171, %v254
    %v256 = vpop.f32.mrf.mxu0
    %v257 = vadd.f32 %v175, %v256
    %258 = vdwg.mxu0
    %259 = vmatprep.subr.mxu0 %v101
    %260 = vmatpush1.msra.mxu0 %v100
    %261 = vmatprep.subr.mxu0 %v97
    %262 = vmatpush1.msra.mxu0 %v96
    %263 = vmatprep.subr.mxu0 %v93
    %264 = vmatpush1.msra.mxu0 %v92
    %265 = vmatprep.subr.mxu0 %v89
    %266 = vmatpush1.msra.mxu0 %v88
    %267 = vmatprep.subr.mxu0 %v85
    %268 = vmatpush1.msra.mxu0 %v84
    %269 = vmatprep.subr.mxu0 %v81
    %270 = vmatpush1.msra.mxu0 %v80
    %271 = vmatprep.subr.mxu0 %v77
    %272 = vmatpush1.msra.mxu0 %v76
    %273 = vmatprep.subr.mxu0 %v73
    %274 = vmatpush1.msra.mxu0 %v72
    %275 = vmatprep.subr.mxu0 %v69
    %276 = vmatpush1.msra.mxu0 %v68
    %277 = vmatprep.subr.mxu0 %v65
    %278 = vmatpush1.msra.mxu0 %v64
    %279 = vmatprep.subr.mxu0 %v61
    %280 = vmatpush1.msra.mxu0 %v60
    %281 = vmatprep.subr.mxu0 %v57
    %282 = vmatpush1.msra.mxu0 %v56
    %283 = vmatprep.subr.mxu0 %v53
    %284 = vmatpush1.msra.mxu0 %v52
    %285 = vmatprep.subr.mxu0 %v49
    %286 = vmatpush1.msra.mxu0 %v48
    %287 = vmatprep.subr.mxu0 %v45
    %288 = vmatpush1.msra.mxu0 %v44
    %289 = vmatprep.subr.mxu0 %v41
    %290 = vmatpush1.msra.mxu0 %v40
    %291 = vmatprep.subr.mxu0 %v165
    %292 = vmatpush2.msra.mxu0 %v164
    %293 = vmatprep.subr.mxu0 %v161
    %294 = vmatpush2.msra.mxu0 %v160
    %295 = vmatprep.subr.mxu0 %v157
    %296 = vmatpush2.msra.mxu0 %v156
    %297 = vmatprep.subr.mxu0 %v153
    %298 = vmatpush2.msra.mxu0 %v152
    %299 = vmatprep.subr.mxu0 %v149
    %300 = vmatpush2.msra.mxu0 %v148
    %301 = vmatprep.subr.mxu0 %v145
    %302 = vmatpush2.msra.mxu0 %v144
    %303 = vmatprep.subr.mxu0 %v141
    %304 = vmatpush2.msra.mxu0 %v140
    %305 = vmatprep.subr.mxu0 %v137
    %306 = vmatpush2.msra.mxu0 %v136
    %307 = vmatprep.subr.mxu0 %v133
    %308 = vmatpush2.msra.mxu0 %v132
    %309 = vmatprep.subr.mxu0 %v129
    %310 = vmatpush2.msra.mxu0 %v128
    %311 = vmatprep.subr.mxu0 %v125
    %312 = vmatpush2.msra.mxu0 %v124
    %313 = vmatprep.subr.mxu0 %v121
    %314 = vmatpush2.msra.mxu0 %v120
    %315 = vmatprep.subr.mxu0 %v117
    %316 = vmatpush2.msra.mxu0 %v116
    %317 = vmatprep.subr.mxu0 %v113
    %318 = vmatpush2.msra.mxu0 %v112
    %319 = vmatprep.subr.mxu0 %v109
    %320 = vmatpush2.msra.mxu0 %v108
    %321 = vmatprep.subr.mxu0 %v105
    %322 = vmatpush2.msra.mxu0 %v104
    %323 = vmatprep.mubr.f32.mxu0 %v37
    %324 = vmatmul.mubr.f32.gmra.mxu0 %v36
    %v325 = vpop.f32.mrf.mxu0
    %v326 = vadd.f32 %v179, %v325
    %v327 = vpop.f32.mrf.mxu0
    %v328 = vadd.f32 %v183, %v327
    %329 = vdwg.mxu0
    %v330 = vxor.u32 %v255, 2147483648
    %v331 = vmul.f32 %v330, 1.442695
    %v332 = vpow.pop %v331
    %v333 = vadd.f32 %v332, 1.0
    %v334 = vrcp.pop %v333
    %v335 = vmul.f32 1.0, %v334
    %v336 = vxor.u32 %v257, 2147483648
    %v337 = vmul.f32 %v336, 1.442695
    %v338 = vpow.pop %v337
    %v339 = vadd.f32 %v338, 1.0
    %v340 = vrcp.pop %v339
    %v341 = vmul.f32 1.0, %v340
    %v342 = vtanh.pop %v326
    %v343 = vxor.u32 %v328, 2147483648
    %v344 = vmul.f32 %v343, 1.442695
    %v345 = vpow.pop %v344
    %v346 = vadd.f32 %v345, 1.0
    %v347 = vrcp.pop %v346
    %v348 = vmul.f32 1.0, %v347
    %v349 = vmul.f32 %v335, %v342
    %v350 = vld [vmem:[%s1] sm:$0xff]
    %v351 = vmul.f32 %v348, %v350
    %v352 = vadd.f32 %v349, %v351
    %v353 = vtanh.pop %v352
    %v354 = vmul.f32 %v341, %v353
    %355 = vst [vmem:[#allocation5] sm:$0xff] %v354
    %356 = vst [vmem:[#allocation6] sm:$0xff] %v352
    %357 = vadd.xlane.f32.xlu0 %v348
    %v358 = vpop.xlane.xlu0 %357
    %v359 = vrcp.pop 128.0
    %v360 = vmul.f32 %v358, %v359
    %vm361 = vcmask 7168
    %362 = vst.msk [vmem:[%s6] sm:$0xff] %vm361, %v360
    // Predicated region
    $region22: #{level_fn.1} parent=1 // pred_check
      _
    $region23: #{level_fn.1} parent=1 // pred_check_branch
      %364 = sbr.rel (0) target = $region25
    $region24: #{level_fn.1} parent=1 // pred_region
      %s366 = ssub.s32 128, 128
      %367 = vsyncadd [#allocation4], %s366
      %s369 = sshll.u32 [#allocation5], 4
      %s370 = int_to_ptr.vmem [resolvable:$true] %s369
      %372 = dma.vmem_to_hbm [thread:$0]  %s370, 128, %s4, [#allocation4]
    $region25: #{level_fn.1} parent=1 // pred_fallthru
      _
    // Predicated region
    $region26: #{level_fn.1} parent=1 // pred_check
      _
    $region27: #{level_fn.1} parent=1 // pred_check_branch
      %374 = sbr.rel (0) target = $region29
    $region28: #{level_fn.1} parent=1 // pred_region
      %s376 = ssub.s32 128, 128
      %377 = vsyncadd [#allocation7], %s376
      %s379 = sshll.u32 [#allocation6], 4
      %s380 = int_to_ptr.vmem [resolvable:$true] %s379
      %382 = dma.vmem_to_hbm [thread:$0]  %s380, 128, %s5, [#allocation7]
    $region29: #{level_fn.1} parent=1 // pred_fallthru
      _
    // Predicated region
    $region30: #{level_fn.1} parent=1 // pred_check
      _
    $region31: #{level_fn.1} parent=1 // pred_check_branch
      %384 = sbr.rel (0) target = $region33
    $region32: #{level_fn.1} parent=1 // pred_region
      _
    $region33: #{level_fn.1} parent=1 // pred_fallthru
      _
    // Predicated region
    $region34: #{level_fn.1} parent=1 // pred_check
      _
    $region35: #{level_fn.1} parent=1 // pred_check_branch
      %386 = sbr.rel (0) target = $region37
    $region36: #{level_fn.1} parent=1 // pred_region
      %387 = dma.done [#allocation4], 128
    $region37: #{level_fn.1} parent=1 // pred_fallthru
      _
    // Predicated region
    $region38: #{level_fn.1} parent=1 // pred_check
      _
    $region39: #{level_fn.1} parent=1 // pred_check_branch
      %389 = sbr.rel (0) target = $region41
    $region40: #{level_fn.1} parent=1 // pred_region
      %390 = dma.done [#allocation7], 128
    $region41: #{level_fn.1} parent=1 // pred_fallthru
      _
    // Predicated region
    $region42: #{level_fn.1} parent=1 // pred_check
      _
    $region43: #{level_fn.1} parent=1 // pred_check_branch
      %392 = sbr.rel (0) target = $region45
    $region44: #{level_fn.1} parent=1 // pred_region
      _
    $region45: #{level_fn.1} parent=1 // pred_fallthru
      _
    %393 = vsyncpa [#allocation3], 1
    %394 = vsyncpa [#allocation4], 1
    %395 = vsyncpa [#allocation7], 1

</llo_original>
